<compile_context>
chip_gen: v5e
topology: v5e:2x2
jax: 0.10.0
libtpu: 0.0.40
codegen_flags: <defaults>
</compile_context>

<pallas_src>
import math
import functools

import jax
import jax.numpy as jnp
from jax.experimental import pallas as pl
from jax.experimental.pallas import tpu as pltpu


def _flash_sdpa_kernel(q_ref, k_ref, v_ref, o_ref, m_sc, l_sc, acc_sc, *,
                       scale, masked):
    """One (bblk, tq) query tile vs one (bblk, tk) KV tile per invocation."""
    kv = pl.program_id(2)

    @pl.when(kv == 0)
    def _init():
        m_sc[...] = jnp.full(m_sc.shape, -jnp.inf, dtype=m_sc.dtype)
        l_sc[...] = jnp.zeros(l_sc.shape, dtype=l_sc.dtype)
        acc_sc[...] = jnp.zeros(acc_sc.shape, dtype=acc_sc.dtype)

    # Fold the 1/sqrt(head_dim) scale into Q (cheaper than scaling the scores).
    q = q_ref[...] * scale            # (bblk, tq, D), input dtype preserved
    k = k_ref[...]                    # (bblk, tk, D)
    v = v_ref[...]                    # (bblk, tk, D)

    # Q @ K^T as a contraction over the trailing D axis — no explicit transpose
    # of the K tile; the MXU consumes K with a transposed contracting dim.
    s = jnp.einsum("bqd,bkd->bqk", q, k, preferred_element_type=jnp.float32)

    if masked:
        # torch.tril: zero (NOT -inf) the strictly-upper triangle.  Zeroed
        # positions still feed the softmax denominator and weight V, exactly
        # like the reference module, so upper-diagonal KV tiles are NOT skipped.
        q0 = pl.program_id(1) * s.shape[1]
        k0 = kv * s.shape[2]
        row = q0 + jax.lax.broadcasted_iota(jnp.int32, s.shape, 1)
        col = k0 + jax.lax.broadcasted_iota(jnp.int32, s.shape, 2)
        s = jnp.where(row >= col, s, 0.0)

    # Online (streaming) softmax update.
    m_prev = m_sc[...]
    m_new = jnp.maximum(m_prev, jnp.max(s, axis=-1, keepdims=True))
    alpha = jnp.exp(m_prev - m_new)          # first step: exp(-inf - finite) = 0
    p = jnp.exp(s - m_new)
    l_sc[...] = alpha * l_sc[...] + jnp.sum(p, axis=-1, keepdims=True)
    acc_sc[...] = alpha * acc_sc[...] + jnp.einsum(
        "bqk,bkd->bqd", p.astype(v.dtype), v, preferred_element_type=jnp.float32)
    m_sc[...] = m_new

    @pl.when(kv == pl.num_programs(2) - 1)
    def _finalize():
        inv_l = pl.reciprocal(l_sc[...], approx=True)   # EUP vrcp slot
        # TODO(synk): for D < 128 this store is a masked partial store (32 of
        # 128 lanes).  In the real multi-head model, fuse heads so the output
        # last dim is H*D >= 128 (lane-dense vst) instead of zero-padding a
        # single head (which would 4x the HBM write traffic here).
        o_ref[...] = (acc_sc[...] * inv_l).astype(o_ref.dtype)


def _pick_tile(extent, target=512):
    """Largest MXU-aligned divisor of `extent` that is <= target.
    Prefers 256-multiples (v6e/v7x 256x256 MXU), falls back to 128 (v5e)."""
    if extent <= target:
        return extent
    for align in (256, 128):
        t = (target // align) * align
        while t >= align:
            if extent % t == 0:
                return t
            t -= align
    # TODO(synk): pad/mask the ragged edge for sequence lengths with no
    # 128-aligned divisor <= target instead of falling back to the full extent.
    return extent


def scaled_dot_product_attention(queries, keys, values, *, masked=False,
                                 tq_target=512, tk_target=512):
    """queries: (B, Sq, D); keys/values: (B, Sk, D) -> (B, Sq, D)."""
    B, Sq, D = queries.shape
    _, Sk, _ = keys.shape
    assert keys.shape == (B, Sk, D) and values.shape == (B, Sk, D)

    tq = _pick_tile(Sq, tq_target)
    tk = _pick_tile(Sk, tk_target)

    # Block multiple batch elements per program so each Q/O DMA is ~1 MiB
    # (amortizes per-grid-step pipeline overhead when Sq*D is small).
    itemsize = jnp.dtype(queries.dtype).itemsize
    target_dma_bytes = 1 << 20
    bblk = max(1, min(B, target_dma_bytes // max(tq * D * itemsize, 1)))
    while B % bblk:
        bblk -= 1
    # v7x has 2 TensorCores per chip: keep >= 2 programs on the parallel axes.
    while bblk > 1 and (B // bblk) * (Sq // tq) < 2:
        bblk -= 1
        while B % bblk:
            bblk -= 1

    grid = (B // bblk, Sq // tq, Sk // tk)
    kv_steps = grid[2]

    kernel = functools.partial(
        _flash_sdpa_kernel, scale=1.0 / math.sqrt(D), masked=masked)

    # Deeper K/V pipelining when per-tile compute is short (small head_dim) and
    # the KV loop is long enough for a third buffer to matter.
    kv_kwargs = {"pipeline_mode": pl.Buffered(3)} if kv_steps >= 3 else {}

    return pl.pallas_call(
        kernel,
        out_shape=jax.ShapeDtypeStruct((B, Sq, D), queries.dtype),
        grid_spec=pltpu.PrefetchScalarGridSpec(
            num_scalar_prefetch=0,
            grid=grid,
            in_specs=[
                pl.BlockSpec((bblk, tq, D), lambda b, qi, ki: (b, qi, 0)),
                pl.BlockSpec((bblk, tk, D), lambda b, qi, ki: (b, ki, 0),
                             **kv_kwargs),
                pl.BlockSpec((bblk, tk, D), lambda b, qi, ki: (b, ki, 0),
                             **kv_kwargs),
            ],
            out_specs=pl.BlockSpec((bblk, tq, D), lambda b, qi, ki: (b, qi, 0)),
            scratch_shapes=[
                pltpu.VMEM((bblk, tq, 1), jnp.float32),   # running max   m
                pltpu.VMEM((bblk, tq, 1), jnp.float32),   # running denom l
                pltpu.VMEM((bblk, tq, D), jnp.float32),   # running output acc
            ],
        ),
        compiler_params=pltpu.CompilerParams(
            dimension_semantics=("parallel", "parallel", "arbitrary"),
            # ~48 MiB: headroom under v7x's 64 MiB physical VMEM while raising
            # the 16 MiB / 32 MiB scoped defaults on v5e / v6e for large tiles.
            vmem_limit_bytes=48 * 1024 * 1024,
        ),
    )(queries, keys, values)


def reference_sdpa(queries, keys, values, *, masked=False):
    """Plain-JAX mirror of the PyTorch module's forward."""
    head_dim = queries.shape[-1]
    scores = jnp.einsum("bqd,bkd->bqk", queries, keys) / math.sqrt(head_dim)
    if masked:
        scores = jnp.tril(scores)
    weights = jax.nn.softmax(scores, axis=-1)
    return jnp.einsum("bqk,bkd->bqd", weights, values)


if __name__ == "__main__":
    # Small shapes consistent with the module: batch=2, seq_len=8, head_dim=32.
    B, S, D = 2, 8, 32

    key = jax.random.PRNGKey(0)
    kq, kk, kv = jax.random.split(key, 3)
    queries = jax.random.normal(kq, (B, S, D), dtype=jnp.float32)
    keys = jax.random.normal(kk, (B, S, D), dtype=jnp.float32)
    values = jax.random.normal(kv, (B, S, D), dtype=jnp.float32)

    ok = True
    for masked in (False, True):
        out = scaled_dot_product_attention(queries, keys, values, masked=masked)
        out = jax.block_until_ready(out)
        ref = reference_sdpa(queries, keys, values, masked=masked)
        assert out.shape == (B, S, D)
        ok &= bool(jnp.allclose(out, ref, atol=2e-3, rtol=2e-3))

    assert ok, "mismatch vs reference"
    print("KERNEL_OK")
</pallas_src>

<mosaic_0001>
module attributes {stable_mosaic.version = 11 : i64} {
  func.func @_flash_sdpa_kernel(%arg0: i32, %arg1: i32, %arg2: i32, %arg3: memref<1x8x32xf32, #tpu.memory_space<vmem>>, %arg4: memref<1x8x32xf32, #tpu.memory_space<vmem>>, %arg5: memref<1x8x32xf32, #tpu.memory_space<vmem>>, %arg6: memref<1x8x32xf32, #tpu.memory_space<vmem>>, %arg7: memref<1x8x1xf32, #tpu.memory_space<vmem>>, %arg8: memref<1x8x1xf32, #tpu.memory_space<vmem>>, %arg9: memref<1x8x32xf32, #tpu.memory_space<vmem>>) attributes {dimension_semantics = [#tpu.dimension_semantics<parallel>, #tpu.dimension_semantics<parallel>, #tpu.dimension_semantics<arbitrary>], iteration_bounds = array<i64: 2, 1, 1>, scalar_prefetch = 0 : i64, scratch_operands = 3 : i64, tpu.core_type = #tpu.core_type<tc>, window_params = [{transform_indices = @transform_0, window_bounds = array<i64: 1, 8, 32>}, {transform_indices = @transform_1, window_bounds = array<i64: 1, 8, 32>}, {transform_indices = @transform_2, window_bounds = array<i64: 1, 8, 32>}, {transform_indices = @transform_3, window_bounds = array<i64: 1, 8, 32>}]} {
    %c0_i32 = arith.constant 0 : i32
    %0 = arith.cmpi eq, %arg2, %c0_i32 : i32
    %1 = arith.extui %0 : i1 to i32
    %c0_i32_0 = arith.constant 0 : i32
    %2 = arith.cmpi ne, %1, %c0_i32_0 : i32
    scf.if %2 {
      %cst_33 = arith.constant 0xFF800000 : f32
      %34 = vector.broadcast %cst_33 : f32 to vector<1x8x1xf32>
      %c0_34 = arith.constant 0 : index
      %c0_35 = arith.constant 0 : index
      %c0_36 = arith.constant 0 : index
      %35 = vector.load %arg7[%c0_34, %c0_35, %c0_36] : memref<1x8x1xf32, #tpu.memory_space<vmem>>, vector<1x8x1xf32>
      tpu.vector_store %arg7[%c0_34, %c0_35, %c0_36], %34 {strides = array<i32>} : memref<1x8x1xf32, #tpu.memory_space<vmem>>, vector<1x8x1xf32>,
      %cst_37 = arith.constant 0.000000e+00 : f32
      %36 = vector.broadcast %cst_37 : f32 to vector<1x8x1xf32>
      %c0_38 = arith.constant 0 : index
      %c0_39 = arith.constant 0 : index
      %c0_40 = arith.constant 0 : index
      %37 = vector.load %arg8[%c0_38, %c0_39, %c0_40] : memref<1x8x1xf32, #tpu.memory_space<vmem>>, vector<1x8x1xf32>
      tpu.vector_store %arg8[%c0_38, %c0_39, %c0_40], %36 {strides = array<i32>} : memref<1x8x1xf32, #tpu.memory_space<vmem>>, vector<1x8x1xf32>,
      %cst_41 = arith.constant 0.000000e+00 : f32
      %38 = vector.broadcast %cst_41 : f32 to vector<1x8x32xf32>
      %c0_42 = arith.constant 0 : index
      %c0_43 = arith.constant 0 : index
      %c0_44 = arith.constant 0 : index
      %39 = vector.load %arg9[%c0_42, %c0_43, %c0_44] : memref<1x8x32xf32, #tpu.memory_space<vmem>>, vector<1x8x32xf32>
      tpu.vector_store %arg9[%c0_42, %c0_43, %c0_44], %38 {strides = array<i32>} : memref<1x8x32xf32, #tpu.memory_space<vmem>>, vector<1x8x32xf32>,
    } else {
    }
    %c0 = arith.constant 0 : index
    %c0_1 = arith.constant 0 : index
    %c0_2 = arith.constant 0 : index
    %3 = vector.load %arg3[%c0, %c0_1, %c0_2] : memref<1x8x32xf32, #tpu.memory_space<vmem>>, vector<1x8x32xf32>
    %cst = arith.constant 0.176776692 : f32
    %4 = vector.broadcast %cst : f32 to vector<1x8x32xf32>
    %5 = arith.mulf %3, %4 : vector<1x8x32xf32>
    %c0_3 = arith.constant 0 : index
    %c0_4 = arith.constant 0 : index
    %c0_5 = arith.constant 0 : index
    %6 = vector.load %arg4[%c0_3, %c0_4, %c0_5] : memref<1x8x32xf32, #tpu.memory_space<vmem>>, vector<1x8x32xf32>
    %c0_6 = arith.constant 0 : index
    %c0_7 = arith.constant 0 : index
    %c0_8 = arith.constant 0 : index
    %7 = vector.load %arg5[%c0_6, %c0_7, %c0_8] : memref<1x8x32xf32, #tpu.memory_space<vmem>>, vector<1x8x32xf32>
    "tpu.trace_start"() <{level = 10 : i32, message = "bqd,bkd->bqk"}> : () -> ()
    %cst_9 = arith.constant dense<0.000000e+00> : vector<1x8x8xf32>
    %8 = tpu.matmul %5, %6, %cst_9 {dimension_numbers = #tpu.dot_dimension_numbers<[2], [2], [1], [1], [0, 0, 0, 1, 1, 1], [0], [0]>} : vector<1x8x32xf32>, vector<1x8x32xf32>, vector<1x8x8xf32> -> vector<1x8x8xf32>
    "tpu.trace_stop"() : () -> ()
    %c0_10 = arith.constant 0 : index
    %c0_11 = arith.constant 0 : index
    %c0_12 = arith.constant 0 : index
    %9 = vector.load %arg7[%c0_10, %c0_11, %c0_12] : memref<1x8x1xf32, #tpu.memory_space<vmem>>, vector<1x8x1xf32>
    %cst_13 = arith.constant dense<0xFF800000> : vector<1x8xf32>
    %10 = vector.multi_reduction <maximumf>, %8, %cst_13 [2] : vector<1x8x8xf32> to vector<1x8xf32>
    %11 = vector.shape_cast %10 : vector<1x8xf32> to vector<1x8x1xf32>
    %12 = arith.maximumf %9, %11 : vector<1x8x1xf32>
    %13 = arith.subf %9, %12 : vector<1x8x1xf32>
    %14 = math.exp %13 : vector<1x8x1xf32>
    %15 = vector.broadcast %12 : vector<1x8x1xf32> to vector<1x8x8xf32>
    %16 = arith.subf %8, %15 : vector<1x8x8xf32>
    %17 = math.exp %16 : vector<1x8x8xf32>
    %c0_14 = arith.constant 0 : index
    %c0_15 = arith.constant 0 : index
    %c0_16 = arith.constant 0 : index
    %18 = vector.load %arg8[%c0_14, %c0_15, %c0_16] : memref<1x8x1xf32, #tpu.memory_space<vmem>>, vector<1x8x1xf32>
    %19 = arith.mulf %14, %18 : vector<1x8x1xf32>
    %cst_17 = arith.constant dense<0.000000e+00> : vector<1x8xf32>
    %20 = vector.multi_reduction <add>, %17, %cst_17 [2] : vector<1x8x8xf32> to vector<1x8xf32>
    %21 = vector.shape_cast %20 : vector<1x8xf32> to vector<1x8x1xf32>
    %22 = arith.addf %19, %21 : vector<1x8x1xf32>
    %c0_18 = arith.constant 0 : index
    %c0_19 = arith.constant 0 : index
    %c0_20 = arith.constant 0 : index
    %23 = vector.load %arg8[%c0_18, %c0_19, %c0_20] : memref<1x8x1xf32, #tpu.memory_space<vmem>>, vector<1x8x1xf32>
    tpu.vector_store %arg8[%c0_18, %c0_19, %c0_20], %22 {strides = array<i32>} : memref<1x8x1xf32, #tpu.memory_space<vmem>>, vector<1x8x1xf32>,
    %c0_21 = arith.constant 0 : index
    %c0_22 = arith.constant 0 : index
    %c0_23 = arith.constant 0 : index
    %24 = vector.load %arg9[%c0_21, %c0_22, %c0_23] : memref<1x8x32xf32, #tpu.memory_space<vmem>>, vector<1x8x32xf32>
    %25 = vector.broadcast %14 : vector<1x8x1xf32> to vector<1x8x32xf32>
    %26 = arith.mulf %25, %24 : vector<1x8x32xf32>
    "tpu.trace_start"() <{level = 10 : i32, message = "bqk,bkd->bqd"}> : () -> ()
    %cst_24 = arith.constant dense<0.000000e+00> : vector<1x8x32xf32>
    %27 = tpu.matmul %17, %7, %cst_24 {dimension_numbers = #tpu.dot_dimension_numbers<[2], [1], [1], [2], [0, 0, 0, 1, 1, 2], [0], [0]>} : vector<1x8x8xf32>, vector<1x8x32xf32>, vector<1x8x32xf32> -> vector<1x8x32xf32>
    "tpu.trace_stop"() : () -> ()
    %28 = arith.addf %26, %27 : vector<1x8x32xf32>
    %c0_25 = arith.constant 0 : index
    %c0_26 = arith.constant 0 : index
    %c0_27 = arith.constant 0 : index
    %29 = vector.load %arg9[%c0_25, %c0_26, %c0_27] : memref<1x8x32xf32, #tpu.memory_space<vmem>>, vector<1x8x32xf32>
    tpu.vector_store %arg9[%c0_25, %c0_26, %c0_27], %28 {strides = array<i32>} : memref<1x8x32xf32, #tpu.memory_space<vmem>>, vector<1x8x32xf32>,
    %c0_28 = arith.constant 0 : index
    %c0_29 = arith.constant 0 : index
    %c0_30 = arith.constant 0 : index
    %30 = vector.load %arg7[%c0_28, %c0_29, %c0_30] : memref<1x8x1xf32, #tpu.memory_space<vmem>>, vector<1x8x1xf32>
    tpu.vector_store %arg7[%c0_28, %c0_29, %c0_30], %12 {strides = array<i32>} : memref<1x8x1xf32, #tpu.memory_space<vmem>>, vector<1x8x1xf32>,
    %c0_i32_31 = arith.constant 0 : i32
    %31 = arith.cmpi eq, %arg2, %c0_i32_31 : i32
    %32 = arith.extui %31 : i1 to i32
    %c0_i32_32 = arith.constant 0 : i32
    %33 = arith.cmpi ne, %32, %c0_i32_32 : i32
    scf.if %33 {
      %c0_33 = arith.constant 0 : index
      %c0_34 = arith.constant 0 : index
      %c0_35 = arith.constant 0 : index
      %34 = vector.load %arg8[%c0_33, %c0_34, %c0_35] : memref<1x8x1xf32, #tpu.memory_space<vmem>>, vector<1x8x1xf32>
      %35 = tpu.reciprocal %34 {approx = true} : vector<1x8x1xf32> -> vector<1x8x1xf32>
      %c0_36 = arith.constant 0 : index
      %c0_37 = arith.constant 0 : index
      %c0_38 = arith.constant 0 : index
      %36 = vector.load %arg9[%c0_36, %c0_37, %c0_38] : memref<1x8x32xf32, #tpu.memory_space<vmem>>, vector<1x8x32xf32>
      %37 = vector.broadcast %35 : vector<1x8x1xf32> to vector<1x8x32xf32>
      %38 = arith.mulf %36, %37 : vector<1x8x32xf32>
      %c0_39 = arith.constant 0 : index
      %c0_40 = arith.constant 0 : index
      %c0_41 = arith.constant 0 : index
      %39 = vector.load %arg6[%c0_39, %c0_40, %c0_41] : memref<1x8x32xf32, #tpu.memory_space<vmem>>, vector<1x8x32xf32>
      tpu.vector_store %arg6[%c0_39, %c0_40, %c0_41], %38 {strides = array<i32>} : memref<1x8x32xf32, #tpu.memory_space<vmem>>, vector<1x8x32xf32>,
    } else {
    }
    return
  }
  func.func @transform_0(%arg0: i32, %arg1: i32, %arg2: i32) -> (i32, i32, i32) {
    %c0_i32 = arith.constant 0 : i32
    %c0_i32_0 = arith.constant 0 : i32
    return %arg0, %arg1, %c0_i32 : i32, i32, i32
  }
  func.func @transform_1(%arg0: i32, %arg1: i32, %arg2: i32) -> (i32, i32, i32) {
    %c0_i32 = arith.constant 0 : i32
    %c0_i32_0 = arith.constant 0 : i32
    return %arg0, %arg2, %c0_i32 : i32, i32, i32
  }
  func.func @transform_2(%arg0: i32, %arg1: i32, %arg2: i32) -> (i32, i32, i32) {
    %c0_i32 = arith.constant 0 : i32
    %c0_i32_0 = arith.constant 0 : i32
    return %arg0, %arg2, %c0_i32 : i32, i32, i32
  }
  func.func @transform_3(%arg0: i32, %arg1: i32, %arg2: i32) -> (i32, i32, i32) {
    %c0_i32 = arith.constant 0 : i32
    %c0_i32_0 = arith.constant 0 : i32
    return %arg0, %arg1, %c0_i32 : i32, i32, i32
  }
}

</mosaic_0001>

<llo_original>
// kernel: tpu_custom_call.1
$region0: #{tpu_custom_call.1}
  #allocation0 [shape = 'u32[]', space=smem, size = 0x4, offset = 0x4, fixed_abs, tag = 'smem constant byte address 0x4 - core index']
  #allocation1 [shape = 'u32[72,128]{1,0:T(1,128)}', space=vmem, size = 0x9000, scoped, tag = 'internal scratch']
  #allocation2 [shape = 'f32[1,8,1]{2,1,0:T(8,128)}', space=vmem, size = 0x1000, scoped, tag = 'scratch operand']
  #allocation3 [shape = 'f32[1,8,1]{2,1,0:T(8,128)}', space=vmem, size = 0x1000, scoped, tag = 'scratch operand']
  #allocation4 [shape = 'f32[1,8,32]{2,1,0:T(8,128)}', space=vmem, size = 0x1000, scoped, tag = 'scratch operand']
  %s0 = inlined_call_operand.hbm [shape: f32[2,8,32], index: 0, kind: input, shape index: {}]
  %s1 = inlined_call_operand.hbm [shape: f32[2,8,32], index: 1, kind: input, shape index: {}]
  %s2 = inlined_call_operand.hbm [shape: f32[2,8,32], index: 2, kind: input, shape index: {}]
  %s3 = inlined_call_operand.hbm [shape: f32[2,8,32], index: 3, kind: output, shape index: {}]
  %s4 = sld [smem:[#allocation0]]
  $region65: #{tpu_custom_call.1} parent=0
    _
  %s6 = ssub.s32 1, %s4
  %s7 = scalar_select 0, %s6, %s4
  $region1: #{tpu_custom_call.1} parent=0
    #allocation5 [shape = 'u8[8192]{0}', space=vmem, size = 0x2000, scoped, tag = 'input window, operand 0']
    #allocation6 [shape = 's32[2]{0}', space=sflag, size = 0x8, scoped, tag = 'scoped memory for tpu_custom_call.1']
    #allocation7 [shape = 's32[2]{0}', space=sflag, size = 0x8, scoped, tag = 'scoped memory for tpu_custom_call.1']
    #allocation8 [shape = 'u8[8192]{0}', space=vmem, size = 0x2000, scoped, tag = 'input window, operand 1']
    #allocation9 [shape = 's32[2]{0}', space=sflag, size = 0x8, scoped, tag = 'scoped memory for tpu_custom_call.1']
    #allocation10 [shape = 'u8[8192]{0}', space=vmem, size = 0x2000, scoped, tag = 'input window, operand 2']
    #allocation11 [shape = 'u8[8192]{0}', space=vmem, size = 0x2000, scoped, tag = 'output window, operand 0']
    %8 = vsyncpa [#allocation6], 0
    %s9 = scalar_lea.sflag [#allocation6], 1
    %10 = vsyncpa %s9, 0
    %11 = vsyncpa [#allocation9], 0
    %s12 = scalar_lea.sflag [#allocation9], 1
    %13 = vsyncpa %s12, 0
    %14 = vsyncpa [#allocation7], 0
    %s15 = scalar_lea.sflag [#allocation7], 1
    %16 = vsyncpa %s15, 0
    loop: start=0, step=1, limit=4
    $region2: #{tpu_custom_call.1} parent=1 // loop_pre_header
      _
    $region3: #{tpu_custom_call.1} parent=1 // loop_header
      %s18 = sphi 0, %s22
      %p19 = scmp.ge.s32.totalorder %s18, 4
      %s25 = sphi 0, %s44
      %s26 = sphi 0, %s40
      %s27 = sphi 0, %s36
      %s28 = sphi 0, %s25
      %s29 = sphi 0, %s26
      %s30 = sphi 0, %s27
      %s31 = sphi 0, %s28
      %s32 = sphi 0, %s29
      %s33 = sphi 0, %s30
      %s49 = sphi 0, %s51
      %s52 = sphi 0, %s49
      %s53 = sphi 0, %s52
      %s69 = sphi 0, %s53
      %s77 = sphi 0, %s79
      %s80 = sphi 0, %s77
      %s81 = sphi 0, %s80
      %s97 = sphi 0, %s81
      %s105 = sphi 0, %s107
      %s108 = sphi 0, %s105
      %s109 = sphi 0, %s108
      %s125 = sphi 0, %s109
      %s133 = sphi 0, %s135
      %s136 = sphi 0, %s133
      %s137 = sphi 0, %s136
      %s153 = sphi 0, %s137
    $region4: #{tpu_custom_call.1} parent=1 // loop_header_branch
      %21 = sbr.rel (%p19) target = $region8
    $region5: #{tpu_custom_call.1} parent=1 // loop_body
      %s23 = ssub.s32 %s18, 1
      %s24 = ssub.s32 %s18, 2
      %s34 = sadd.s32 1, %s27
      %p35 = scmp.ge.s32.totalorder %s34, 1
      %s36 = scalar_select %p35, 0, %s34
      %s37 = sadd.s32 1, %s26
      %s38 = scalar_select %p35, %s37, %s26
      %p39 = scmp.ge.s32.totalorder %s38, 1
      %s40 = scalar_select %p39, 0, %s38
      %s41 = sadd.s32 1, %s25
      %s42 = scalar_select %p39, %s41, %s25
      %p43 = scmp.ge.s32.totalorder %s42, 2
      %s44 = scalar_select %p43, 0, %s42
      %s45 = ssub.s32 %s25, %s44
      %s46 = ssub.s32 %s26, %s40
      %s47 = sor.u32 %s45, %s46
      %p48 = scmp.eq.s32.totalorder %s47, 0
      %s50 = sadd.s32 %s49, 1
      %s51 = scalar_select %p48, %s49, %s50
      %p54 = pneg %p48
      %p55 = scmp.eq.s32.totalorder %s18, 1
      %p56 = por %p54, %p55
      %p57 = scmp.ne.s32.totalorder %s49, %s52
      %p58 = scmp.eq.s32.totalorder %s18, 0
      %p59 = por %p57, %p58
      %p60 = scmp.ne.s32.totalorder %s49, %s52
      %p61 = scmp.eq.s32.totalorder %s23, 1
      %p62 = por %p60, %p61
      %p63 = scmp.ne.s32.totalorder %s52, %s53
      %p64 = scmp.eq.s32.totalorder %s23, 0
      %p65 = por %p63, %p64
      %p66 = scmp.ne.s32.totalorder %s52, %s53
      %p67 = scmp.eq.s32.totalorder %s24, 1
      %p68 = por %p66, %p67
      %p70 = scmp.ne.s32.totalorder %s53, %s69
      %p71 = scmp.eq.s32.totalorder %s24, 0
      %p72 = por %p70, %p71
      %s73 = ssub.s32 %s25, %s44
      %s74 = ssub.s32 %s27, %s36
      %s75 = sor.u32 %s73, %s74
      %p76 = scmp.eq.s32.totalorder %s75, 0
      %s78 = sadd.s32 %s77, 1
      %s79 = scalar_select %p76, %s77, %s78
      %p82 = pneg %p76
      %p83 = scmp.eq.s32.totalorder %s18, 1
      %p84 = por %p82, %p83
      %p85 = scmp.ne.s32.totalorder %s77, %s80
      %p86 = scmp.eq.s32.totalorder %s18, 0
      %p87 = por %p85, %p86
      %p88 = scmp.ne.s32.totalorder %s77, %s80
      %p89 = scmp.eq.s32.totalorder %s23, 1
      %p90 = por %p88, %p89
      %p91 = scmp.ne.s32.totalorder %s80, %s81
      %p92 = scmp.eq.s32.totalorder %s23, 0
      %p93 = por %p91, %p92
      %p94 = scmp.ne.s32.totalorder %s80, %s81
      %p95 = scmp.eq.s32.totalorder %s24, 1
      %p96 = por %p94, %p95
      %p98 = scmp.ne.s32.totalorder %s81, %s97
      %p99 = scmp.eq.s32.totalorder %s24, 0
      %p100 = por %p98, %p99
      %s101 = ssub.s32 %s25, %s44
      %s102 = ssub.s32 %s27, %s36
      %s103 = sor.u32 %s101, %s102
      %p104 = scmp.eq.s32.totalorder %s103, 0
      %s106 = sadd.s32 %s105, 1
      %s107 = scalar_select %p104, %s105, %s106
      %p110 = pneg %p104
      %p111 = scmp.eq.s32.totalorder %s18, 1
      %p112 = por %p110, %p111
      %p113 = scmp.ne.s32.totalorder %s105, %s108
      %p114 = scmp.eq.s32.totalorder %s18, 0
      %p115 = por %p113, %p114
      %p116 = scmp.ne.s32.totalorder %s105, %s108
      %p117 = scmp.eq.s32.totalorder %s23, 1
      %p118 = por %p116, %p117
      %p119 = scmp.ne.s32.totalorder %s108, %s109
      %p120 = scmp.eq.s32.totalorder %s23, 0
      %p121 = por %p119, %p120
      %p122 = scmp.ne.s32.totalorder %s108, %s109
      %p123 = scmp.eq.s32.totalorder %s24, 1
      %p124 = por %p122, %p123
      %p126 = scmp.ne.s32.totalorder %s109, %s125
      %p127 = scmp.eq.s32.totalorder %s24, 0
      %p128 = por %p126, %p127
      %s129 = ssub.s32 %s25, %s44
      %s130 = ssub.s32 %s26, %s40
      %s131 = sor.u32 %s129, %s130
      %p132 = scmp.eq.s32.totalorder %s131, 0
      %s134 = sadd.s32 %s133, 1
      %s135 = scalar_select %p132, %s133, %s134
      %p138 = pneg %p132
      %p139 = scmp.eq.s32.totalorder %s18, 1
      %p140 = por %p138, %p139
      %p141 = scmp.ne.s32.totalorder %s133, %s136
      %p142 = scmp.eq.s32.totalorder %s18, 0
      %p143 = por %p141, %p142
      %p144 = scmp.ne.s32.totalorder %s133, %s136
      %p145 = scmp.eq.s32.totalorder %s23, 1
      %p146 = por %p144, %p145
      %p147 = scmp.ne.s32.totalorder %s136, %s137
      %p148 = scmp.eq.s32.totalorder %s23, 0
      %p149 = por %p147, %p148
      %p150 = scmp.ne.s32.totalorder %s136, %s137
      %p151 = scmp.eq.s32.totalorder %s24, 1
      %p152 = por %p150, %p151
      %p154 = scmp.ne.s32.totalorder %s137, %s153
      %p155 = scmp.eq.s32.totalorder %s24, 0
      %p156 = por %p154, %p155
      %p157 = scmp.le.s32.totalorder 1, %s18
      %p158 = scmp.lt.s32.totalorder %s18, 3
      %p159 = pnand %p157, %p158
      %p160 = pneg %p159
      // Predicated region
      $region9: #{tpu_custom_call.1} parent=5 // pred_check
        _
      $region10: #{tpu_custom_call.1} parent=5 // pred_check_branch
        %162 = sbr.rel (%p159) target = $region12
      $region11: #{tpu_custom_call.1} parent=5 // pred_region
        %s163 = ssub.s32 %s18, 1
      $region12: #{tpu_custom_call.1} parent=5 // pred_fallthru
        _
      %p164 = scmp.lt.s32.totalorder %s18, 2
      // Predicated region
      $region13: #{tpu_custom_call.1} parent=5 // pred_check
        %p165 = pneg %p164
      $region14: #{tpu_custom_call.1} parent=5 // pred_check_branch
        %167 = sbr.rel (%p165) target = $region16
      $region15: #{tpu_custom_call.1} parent=5 // pred_region
        // Predicated region
        $region17: #{tpu_custom_call.1} parent=15 // pred_check
          %p168 = pneg %p59
        $region18: #{tpu_custom_call.1} parent=15 // pred_check_branch
          %170 = sbr.rel (%p168) target = $region20
        $region19: #{tpu_custom_call.1} parent=15 // pred_region
          %s171 = sand.u32 %s49, 1
          %s172 = scalar_lea.sflag [#allocation6], %s171
          %s173 = sand.u32 %s49, 1
          %s174 = smul.addr %s173, 8
          %s175 = scalar_lea.vmem [#allocation5], %s174
          %177 = vsyncadd %s172, 0
          %s178 = sadd.s32 %s26, %s25
          %s179 = smul.addr %s178, 8
          %s180 = scalar_lea.hbm %s0, %s179
          %s182 = sshll.u32 %s180, 4
          %s183 = int_to_ptr.hbm [resolvable:$true] %s182
          %s184 = sshll.u32 %s175, 4
          %s185 = int_to_ptr.vmem [resolvable:$true] %s184
          %187 = dma.hbm_to_vmem [thread:$0]  %s183, 128, %s185, %s172
        $region20: #{tpu_custom_call.1} parent=15 // pred_fallthru
          _
        // Predicated region
        $region21: #{tpu_custom_call.1} parent=15 // pred_check
          %p188 = pneg %p87
        $region22: #{tpu_custom_call.1} parent=15 // pred_check_branch
          %190 = sbr.rel (%p188) target = $region24
        $region23: #{tpu_custom_call.1} parent=15 // pred_region
          %s191 = sand.u32 %s18, 1
          %s192 = scalar_lea.sflag [#allocation9], %s191
          %s193 = sand.u32 %s77, 1
          %s194 = smul.addr %s193, 8
          %s195 = scalar_lea.vmem [#allocation8], %s194
          %197 = vsyncadd %s192, 0
          %s198 = sadd.s32 %s27, %s25
          %s199 = smul.addr %s198, 8
          %s200 = scalar_lea.hbm %s1, %s199
          %s202 = sshll.u32 %s200, 4
          %s203 = int_to_ptr.hbm [resolvable:$true] %s202
          %s204 = sshll.u32 %s195, 4
          %s205 = int_to_ptr.vmem [resolvable:$true] %s204
          %207 = dma.hbm_to_vmem [thread:$0]  %s203, 128, %s205, %s192
        $region24: #{tpu_custom_call.1} parent=15 // pred_fallthru
          _
        // Predicated region
        $region25: #{tpu_custom_call.1} parent=15 // pred_check
          %p208 = pneg %p115
        $region26: #{tpu_custom_call.1} parent=15 // pred_check_branch
          %210 = sbr.rel (%p208) target = $region28
        $region27: #{tpu_custom_call.1} parent=15 // pred_region
          %s211 = sand.u32 %s18, 1
          %s212 = scalar_lea.sflag [#allocation9], %s211
          %s213 = sand.u32 %s105, 1
          %s214 = smul.addr %s213, 8
          %s215 = scalar_lea.vmem [#allocation10], %s214
          %217 = vsyncadd %s212, 0
          %s218 = sadd.s32 %s27, %s25
          %s219 = smul.addr %s218, 8
          %s220 = scalar_lea.hbm %s2, %s219
          %s222 = sshll.u32 %s220, 4
          %s223 = int_to_ptr.hbm [resolvable:$true] %s222
          %s224 = sshll.u32 %s215, 4
          %s225 = int_to_ptr.vmem [resolvable:$true] %s224
          %227 = dma.hbm_to_vmem [thread:$0]  %s223, 128, %s225, %s212
        $region28: #{tpu_custom_call.1} parent=15 // pred_fallthru
          _
      $region16: #{tpu_custom_call.1} parent=5 // pred_fallthru
        _
      %p228 = scmp.le.s32.totalorder 1, %s18
      %p229 = scmp.lt.s32.totalorder %s18, 3
      %p230 = pnand %p228, %p229
      %p231 = pneg %p230
      // Predicated region
      $region29: #{tpu_custom_call.1} parent=5 // pred_check
        _
      $region30: #{tpu_custom_call.1} parent=5 // pred_check_branch
        %233 = sbr.rel (%p230) target = $region32
      $region31: #{tpu_custom_call.1} parent=5 // pred_region
        %s234 = ssub.s32 %s18, 1
        %s235 = sand.u32 %s52, 1
        %s236 = scalar_lea.sflag [#allocation6], %s235
        %s237 = sand.u32 %s52, 1
        %s238 = smul.addr %s237, 8
        %s239 = scalar_lea.vmem [#allocation5], %s238
        // Predicated region
        $region33: #{tpu_custom_call.1} parent=31 // pred_check
          %p240 = pneg %p65
        $region34: #{tpu_custom_call.1} parent=31 // pred_check_branch
          %242 = sbr.rel (%p240) target = $region36
        $region35: #{tpu_custom_call.1} parent=31 // pred_region
          %244 = dma.done %s236, 128
        $region36: #{tpu_custom_call.1} parent=31 // pred_fallthru
          _
        %s245 = sand.u32 %s23, 1
        %s246 = scalar_lea.sflag [#allocation9], %s245
        %s247 = sand.u32 %s80, 1
        %s248 = smul.addr %s247, 8
        %s249 = scalar_lea.vmem [#allocation8], %s248
        // Predicated region
        $region37: #{tpu_custom_call.1} parent=31 // pred_check
          %p250 = pneg %p93
        $region38: #{tpu_custom_call.1} parent=31 // pred_check_branch
          %252 = sbr.rel (%p250) target = $region40
        $region39: #{tpu_custom_call.1} parent=31 // pred_region
          %254 = dma.done %s246, 128
        $region40: #{tpu_custom_call.1} parent=31 // pred_fallthru
          _
        %s255 = sand.u32 %s23, 1
        %s256 = scalar_lea.sflag [#allocation9], %s255
        %s257 = sand.u32 %s108, 1
        %s258 = smul.addr %s257, 8
        %s259 = scalar_lea.vmem [#allocation10], %s258
        // Predicated region
        $region41: #{tpu_custom_call.1} parent=31 // pred_check
          %p260 = pneg %p121
        $region42: #{tpu_custom_call.1} parent=31 // pred_check_branch
          %262 = sbr.rel (%p260) target = $region44
        $region43: #{tpu_custom_call.1} parent=31 // pred_region
          %264 = dma.done %s256, 128
        $region44: #{tpu_custom_call.1} parent=31 // pred_fallthru
          _
        %s265 = sand.u32 %s52, 1
        %s266 = scalar_lea.sflag [#allocation6], %s265
        %s267 = sand.u32 %s52, 1
        %s268 = smul.addr %s267, 8
        %s269 = scalar_lea.vmem [#allocation5], %s268
        %p270 = pneg %p65
        %p271 = pneg %p62
        %s272 = sand.u32 %s23, 1
        %s273 = scalar_lea.sflag [#allocation9], %s272
        %s274 = sand.u32 %s80, 1
        %s275 = smul.addr %s274, 8
        %s276 = scalar_lea.vmem [#allocation8], %s275
        %p277 = pneg %p93
        %p278 = pneg %p90
        %s279 = sand.u32 %s23, 1
        %s280 = scalar_lea.sflag [#allocation9], %s279
        %s281 = sand.u32 %s108, 1
        %s282 = smul.addr %s281, 8
        %s283 = scalar_lea.vmem [#allocation10], %s282
        %p284 = pneg %p121
        %p285 = pneg %p118
        %p286 = pneg %p149
        %p287 = pneg %p146
        %s288 = sand.u32 %s136, 1
        %s289 = scalar_lea.sflag [#allocation7], %s288
        %s290 = sand.u32 %s136, 1
        %s291 = smul.addr %s290, 8
        %s292 = scalar_lea.vmem [#allocation11], %s291
        %p293 = scmp.eq.s32.totalorder %s30, 0
        // Predicated region
        $region45: #{tpu_custom_call.1} parent=31 // pred_check
          %p294 = pneg %p293
        $region46: #{tpu_custom_call.1} parent=31 // pred_check_branch
          %296 = sbr.rel (%p294) target = $region48
        $region47: #{tpu_custom_call.1} parent=31 // pred_region
          %vm297 = vcmask 7168
          %298 = vst.msk [vmem:[#allocation2] sm:$0xff] %vm297, -inf
          %299 = vst.msk [vmem:[#allocation3] sm:$0xff] %vm297, 0.0
          %vm300 = vcmask 261120
          %301 = vst.msk [vmem:[#allocation4] sm:$0xff] %vm300, 0.0
        $region48: #{tpu_custom_call.1} parent=31 // pred_fallthru
          _
        %v302 = vld [vmem:[%s239] sm:$0xff]
        %v303 = vmul.f32 %v302, 0.17677669
        %v304 = vld [vmem:[%s249] sm:$0xff]
        %v305 = vld [vmem:[%s259] sm:$0xff]
        %vm306 = vcmask 261120
        %v308 = vsel %vm306, %v303, 0
        %v311 = vsel %vm306, %v304, 0
        %313 = vmatpush.xpose.msra.mxu0 0.0
        %314 = vmatpush.xpose.msra.mxu0 0.0
        %315 = vmatpush.xpose.msra.mxu0 0.0
        %316 = vmatpush.xpose.msra.mxu0 0.0
        %317 = vmatpush.xpose.msra.mxu0 0.0
        %318 = vmatpush.xpose.msra.mxu0 0.0
        %319 = vmatpush.xpose.msra.mxu0 0.0
        %320 = vmatpush.xpose.msra.mxu0 0.0
        %321 = vmatpush.xpose.msra.mxu0 0.0
        %322 = vmatpush.xpose.msra.mxu0 0.0
        %323 = vmatpush.xpose.msra.mxu0 0.0
        %324 = vmatpush.xpose.msra.mxu0 0.0
        %325 = vmatpush.xpose.msra.mxu0 0.0
        %326 = vmatpush.xpose.msra.mxu0 0.0
        %327 = vmatpush.xpose.msra.mxu0 0.0
        %328 = vmatpush.xpose.msra.mxu0 %v311
        %329 = vmatmul.f32.gmra.mxu0 %v308
        %v330 = vpop.f32.mrf.mxu0
        %v331 = vadd.f32 0.0, %v330
        %332 = vdwg.mxu0
        %v333 = vld [vmem:[#allocation2] sm:$0xff]
        %vm334 = vcmask 64512
        %v335 = vsel %vm334, %v331, -inf
        %336 = vmax.xlane.f32.xlu0 %v335
        %v337 = vpop.xlane.xlu0 %336
        %v338 = vmax.f32 %v333, %v337
        %v339 = vsub.f32 %v333, %v338
        %v340 = vmul.f32 %v339, 1.442695
        %v341 = vpow.pop %v340
        %343 = vset.pattern.permute.xlu0 0
        %344 = vperm.xlu0 %343, %v338
        %v345 = vpop.permute.xlu0 %344
        %v347 = vsub.f32 %v331, %v345
        %v348 = vmul.f32 %v347, 1.442695
        %v349 = vpow.pop %v348
        %v350 = vld [vmem:[#allocation3] sm:$0xff]
        %v351 = vmul.f32 %v341, %v350
        %v352 = vsel %vm334, %v349, 0.0
        %353 = vadd.xlane.f32.xlu0 %v352
        %v354 = vpop.xlane.xlu0 %353
        %v355 = vadd.f32 %v351, %v354
        %vm356 = vcmask 7168
        %357 = vst.msk [vmem:[#allocation3] sm:$0xff] %vm356, %v355
        %v358 = vld [vmem:[#allocation4] sm:$0xff]
        %360 = vset.pattern.permute.xlu0 0
        %361 = vperm.xlu0 %360, %v341
        %v362 = vpop.permute.xlu0 %361
        %v364 = vmul.f32 %v362, %v358
        %v366 = vsel %vm334, %v349, 0
        %368 = vmatpush.msra.mxu0 0.0
        %369 = vmatpush.msra.mxu0 0.0
        %370 = vmatpush.msra.mxu0 0.0
        %371 = vmatpush.msra.mxu0 0.0
        %372 = vmatpush.msra.mxu0 0.0
        %373 = vmatpush.msra.mxu0 0.0
        %374 = vmatpush.msra.mxu0 0.0
        %375 = vmatpush.msra.mxu0 0.0
        %376 = vmatpush.msra.mxu0 0.0
        %377 = vmatpush.msra.mxu0 0.0
        %378 = vmatpush.msra.mxu0 0.0
        %379 = vmatpush.msra.mxu0 0.0
        %380 = vmatpush.msra.mxu0 0.0
        %381 = vmatpush.msra.mxu0 0.0
        %382 = vmatpush.msra.mxu0 0.0
        %383 = vmatpush.msra.mxu0 %v305
        %384 = vmatmul.f32.gmra.mxu0 %v366
        %v385 = vpop.f32.mrf.mxu0
        %v386 = vadd.f32 0.0, %v385
        %387 = vdwg.mxu0
        %v388 = vadd.f32 %v364, %v386
        %389 = vst.msk [vmem:[#allocation4] sm:$0xff] %vm306, %v388
        %390 = vst.msk [vmem:[#allocation2] sm:$0xff] %vm356, %v338
        // Predicated region
        $region49: #{tpu_custom_call.1} parent=31 // pred_check
          %p391 = pneg %p293
        $region50: #{tpu_custom_call.1} parent=31 // pred_check_branch
          %393 = sbr.rel (%p391) target = $region52
        $region51: #{tpu_custom_call.1} parent=31 // pred_region
          %v394 = vld [vmem:[#allocation3] sm:$0xff]
          %v395 = vrcp.pop %v394
          %v396 = vld [vmem:[#allocation4] sm:$0xff]
          %398 = vset.pattern.permute.xlu0 0
          %399 = vperm.xlu0 %398, %v395
          %v400 = vpop.permute.xlu0 %399
          %v402 = vmul.f32 %v396, %v400
          %403 = vst.msk [vmem:[%s292] sm:$0xff] %vm306, %v402
        $region52: #{tpu_custom_call.1} parent=31 // pred_fallthru
          _
        %s404 = sand.u32 %s136, 1
        %s405 = scalar_lea.sflag [#allocation7], %s404
        %s406 = sand.u32 %s136, 1
        %s407 = smul.addr %s406, 8
        %s408 = scalar_lea.vmem [#allocation11], %s407
        // Predicated region
        $region53: #{tpu_custom_call.1} parent=31 // pred_check
          %p409 = pneg %p146
        $region54: #{tpu_custom_call.1} parent=31 // pred_check_branch
          %411 = sbr.rel (%p409) target = $region56
        $region55: #{tpu_custom_call.1} parent=31 // pred_region
          %413 = vsyncadd %s405, 0
          %s414 = sadd.s32 %s29, %s28
          %s415 = smul.addr %s414, 8
          %s416 = scalar_lea.hbm %s3, %s415
          %s418 = sshll.u32 %s408, 4
          %s419 = int_to_ptr.vmem [resolvable:$true] %s418
          %s420 = sshll.u32 %s416, 4
          %s421 = int_to_ptr.hbm [resolvable:$true] %s420
          %423 = dma.vmem_to_hbm [thread:$0]  %s419, 128, %s421, %s405
        $region56: #{tpu_custom_call.1} parent=31 // pred_fallthru
          _
      $region32: #{tpu_custom_call.1} parent=5 // pred_fallthru
        _
      %p424 = scmp.le.s32.totalorder 2, %s18
      // Predicated region
      $region57: #{tpu_custom_call.1} parent=5 // pred_check
        %p425 = pneg %p424
      $region58: #{tpu_custom_call.1} parent=5 // pred_check_branch
        %427 = sbr.rel (%p425) target = $region60
      $region59: #{tpu_custom_call.1} parent=5 // pred_region
        %s428 = ssub.s32 %s18, 2
        // Predicated region
        $region61: #{tpu_custom_call.1} parent=59 // pred_check
          %p429 = pneg %p152
        $region62: #{tpu_custom_call.1} parent=59 // pred_check_branch
          %431 = sbr.rel (%p429) target = $region64
        $region63: #{tpu_custom_call.1} parent=59 // pred_region
          %s432 = sand.u32 %s137, 1
          %s433 = scalar_lea.sflag [#allocation7], %s432
          %s434 = sand.u32 %s137, 1
          %s435 = smul.addr %s434, 8
          %s436 = scalar_lea.vmem [#allocation11], %s435
          %438 = dma.done %s433, 128
        $region64: #{tpu_custom_call.1} parent=59 // pred_fallthru
          _
      $region60: #{tpu_custom_call.1} parent=5 // pred_fallthru
        _
    $region6: #{tpu_custom_call.1} parent=1 // loop_footer
      %s22 = sadd.s32 1, %s18
    $region7: #{tpu_custom_call.1} parent=1 // loop_footer_branch
      %17 = sbr.rel target = $region3
    $region8: #{tpu_custom_call.1} parent=1 // loop_exit
      _
    %439 = vsyncpa [#allocation6], 1
    %s440 = scalar_lea.sflag [#allocation6], 1
    %441 = vsyncpa %s440, 1
    %442 = vsyncpa [#allocation9], 1
    %s443 = scalar_lea.sflag [#allocation9], 1
    %444 = vsyncpa %s443, 1
    %445 = vsyncpa [#allocation7], 1
    %s446 = scalar_lea.sflag [#allocation7], 1
    %447 = vsyncpa %s446, 1

</llo_original>
